<compile_context>
chip_gen: v7x
topology: tpu7x:2x2x1
jax: 0.10.0
libtpu: 0.0.40
codegen_flags: <defaults>
</compile_context>

<pallas_src>
import functools

import jax
import jax.numpy as jnp
from jax.experimental import pallas as pl
from jax.experimental.pallas import tpu as pltpu

BN_EPS = 1e-5


# --------------------------------------------------------------------------- #
# Kernels
# --------------------------------------------------------------------------- #
def _stats_kernel(x_ref, mean_ref, rstd_ref, *, n_rows, tile_b, needs_mask):
    """Pass 1: streaming per-feature sum / sum-of-squares -> mean / rstd."""
    i = pl.program_id(0)

    @pl.when(i == 0)
    def _init():
        mean_ref[...] = jnp.zeros_like(mean_ref)    # running sum(x)
        rstd_ref[...] = jnp.zeros_like(rstd_ref)    # running sum(x^2)

    x = x_ref[...].astype(jnp.float32)              # (tile_b, D)
    if needs_mask:
        # Zero rows past the true batch size in the (padded) last tile so they
        # do not pollute the batch statistics.
        rid = jax.lax.broadcasted_iota(jnp.int32, x.shape, 0)
        x = jnp.where(rid < (n_rows - i * tile_b), x, 0.0)

    mean_ref[...] += jnp.sum(x, axis=0, keepdims=True)
    rstd_ref[...] += jnp.sum(x * x, axis=0, keepdims=True)

    @pl.when(i == pl.num_programs(0) - 1)
    def _finalize():
        inv_n = 1.0 / n_rows
        mean = mean_ref[...] * inv_n
        var = jnp.maximum(rstd_ref[...] * inv_n - mean * mean, 0.0)
        mean_ref[...] = mean
        rstd_ref[...] = jax.lax.rsqrt(var + BN_EPS)


def _logits_kernel(x_ref, w_eff_ref, off_ref, o_ref):
    """Pass 2: o = sigmoid(sum_d x_d * w_eff_d + offset)  (BN already folded)."""
    x = x_ref[...].astype(jnp.float32)                                # (tile_b, D)
    s = jnp.sum(x * w_eff_ref[...], axis=-1, keepdims=True) + off_ref[0, 0]
    # sigmoid(x) = 0.5 * tanh(0.5 x) + 0.5  -> divide-free, tanh on the EUP.
    o_ref[...] = (0.5 * jnp.tanh(0.5 * s) + 0.5).astype(o_ref.dtype)


# --------------------------------------------------------------------------- #
# Wrapper
# --------------------------------------------------------------------------- #
def _vmem_capacity_bytes():
    try:
        return int(pltpu.get_tpu_info().vmem_capacity_bytes)
    except Exception:
        return 64 * 1024 * 1024        # v7x per-TC VMEM; conservative default


def _round_up(x, m):
    return ((x + m - 1) // m) * m


def _pick_tile_b(n_rows, n_feat, itemsize):
    """Largest batch tile whose double-buffered x slab stays well under VMEM."""
    budget = max(_vmem_capacity_bytes() // 16, 2 * 1024 * 1024)
    lane_feat = max(_round_up(n_feat, 128), 128)     # last dim pads to 128 lanes
    row_align = 8 if itemsize >= 4 else 16           # f32 vs bf16 min sublane tile
    rows = budget // (2 * lane_feat * itemsize)      # 2 = double buffering
    rows = max(row_align, min(int(rows), 2048))
    rows = (rows // row_align) * row_align
    return n_rows if n_rows <= rows else rows


def lr_forward(x, gamma, beta, w, b, *, tile_b=None):
    """BatchNorm1d(train-mode stats) -> Linear(D, 1) -> Sigmoid.

    x: (B, D) any float dtype; gamma/beta: (D,); w: (1, D) torch layout; b: (1,).
    Returns (B, 1) float32 probabilities.
    """
    B, D = x.shape
    if tile_b is None:
        tile_b = _pick_tile_b(B, D, jnp.dtype(x.dtype).itemsize)
    nb = pl.cdiv(B, tile_b)
    vmem_limit = 32 * 1024 * 1024

    # ---- pass 1: streaming batch statistics -------------------------------
    mean, rstd = pl.pallas_call(
        functools.partial(_stats_kernel, n_rows=B, tile_b=tile_b,
                          needs_mask=(B % tile_b) != 0),
        grid=(nb,),
        in_specs=[pl.BlockSpec((tile_b, D), lambda i: (i, 0))],
        out_specs=(pl.BlockSpec((1, D), lambda i: (0, 0)),
                   pl.BlockSpec((1, D), lambda i: (0, 0))),
        out_shape=(jax.ShapeDtypeStruct((1, D), jnp.float32),
                   jax.ShapeDtypeStruct((1, D), jnp.float32)),
        compiler_params=pltpu.CompilerParams(
            dimension_semantics=("arbitrary",),      # reduction over B tiles
            vmem_limit_bytes=vmem_limit),
    )(x)

    # ---- per-feature parameter folding (O(D), tiny, done once) -------------
    w_row = w.reshape(D).astype(jnp.float32)
    gamma_f = gamma.reshape(D).astype(jnp.float32)
    beta_f = beta.reshape(D).astype(jnp.float32)
    b_f = b.reshape(()).astype(jnp.float32)

    w_eff = gamma_f * w_row * rstd.reshape(D)                           # (D,)
    offset = b_f + jnp.dot(beta_f, w_row) - jnp.dot(mean.reshape(D), w_eff)

    # ---- pass 2: fused (x . w_eff + offset) -> sigmoid ----------------------
    out = pl.pallas_call(
        _logits_kernel,
        grid=(nb,),
        in_specs=[
            pl.BlockSpec((tile_b, D), lambda i: (i, 0)),                # x tile
            pl.BlockSpec((1, D), lambda i: (0, 0)),                     # w_eff
            pl.BlockSpec(memory_space=pltpu.MemorySpace.SMEM),          # offset
        ],
        out_specs=pl.BlockSpec((tile_b, 1), lambda i: (i, 0)),
        out_shape=jax.ShapeDtypeStruct((B, 1), jnp.float32),
        compiler_params=pltpu.CompilerParams(
            dimension_semantics=("parallel",),       # independent B tiles
            vmem_limit_bytes=vmem_limit),
    )(x, w_eff.reshape(1, D), offset.reshape(1, 1).astype(jnp.float32))
    return out


# --------------------------------------------------------------------------- #
# Self-test
# --------------------------------------------------------------------------- #
def _reference(x, gamma, beta, w, b):
    xf = x.astype(jnp.float32)
    mean = jnp.mean(xf, axis=0, keepdims=True)
    var = jnp.mean((xf - mean) ** 2, axis=0, keepdims=True)   # biased (train mode)
    x_bn = (xf - mean) / jnp.sqrt(var + BN_EPS) * gamma + beta
    return jax.nn.sigmoid(x_bn @ w.T.astype(jnp.float32) + b)


if __name__ == "__main__":
    # Small shapes: hidden_dim1=16, hidden_dim2=16 -> D=32 (use_emo2vec_feat /
    # use_url assumed False), batch=8.
    hidden_dim1, hidden_dim2 = 16, 16
    D = hidden_dim1 + hidden_dim2
    B = 8

    key = jax.random.PRNGKey(0)
    kx, kw, kb, kg, kbt, kx2 = jax.random.split(key, 6)

    x = jax.random.normal(kx, (B, D), dtype=jnp.float32)
    # PyTorch defaults: BatchNorm1d gamma=1, beta=0; Linear uniform(+-1/sqrt(D)).
    gamma = jnp.ones((D,), dtype=jnp.float32)
    beta = jnp.zeros((D,), dtype=jnp.float32)
    bound = 1.0 / float(D) ** 0.5
    w = jax.random.uniform(kw, (1, D), minval=-bound, maxval=bound, dtype=jnp.float32)
    b = jax.random.uniform(kb, (1,), minval=-bound, maxval=bound, dtype=jnp.float32)

    out = jax.block_until_ready(lr_forward(x, gamma, beta, w, b))
    ref = _reference(x, gamma, beta, w, b)
    assert out.shape == (B, 1)
    assert jnp.allclose(out, ref, atol=1e-5, rtol=1e-5)

    # Extra check: multi-tile grid with a remainder tile (B=20, TILE_B=8) and
    # non-trivial affine BN params, exercising streaming stats + masking + the
    # partial last output block.
    gamma2 = 1.0 + 0.1 * jax.random.normal(kg, (D,), dtype=jnp.float32)
    beta2 = 0.1 * jax.random.normal(kbt, (D,), dtype=jnp.float32)
    x2 = jax.random.normal(kx2, (20, D), dtype=jnp.float32)
    out2 = jax.block_until_ready(lr_forward(x2, gamma2, beta2, w, b, tile_b=8))
    ref2 = _reference(x2, gamma2, beta2, w, b)
    assert out2.shape == (20, 1)
    assert jnp.allclose(out2, ref2, atol=1e-5, rtol=1e-5)

    print("KERNEL_OK")
</pallas_src>

<mosaic_0001>
module attributes {stable_mosaic.version = 11 : i64} {
  func.func @_stats_kernel(%arg0: i32, %arg1: memref<8x32xf32, #tpu.memory_space<vmem>>, %arg2: memref<1x32xf32, #tpu.memory_space<vmem>>, %arg3: memref<1x32xf32, #tpu.memory_space<vmem>>) attributes {dimension_semantics = [#tpu.dimension_semantics<arbitrary>], iteration_bounds = array<i64: 1>, scalar_prefetch = 0 : i64, scratch_operands = 0 : i64, tpu.core_type = #tpu.core_type<tc>, window_params = [{transform_indices = @transform_0, window_bounds = array<i64: 8, 32>}, {pipeline_mode = #tpu.pipeline_mode<synchronous>, transform_indices = @transform_1, window_bounds = array<i64: 1, 32>}, {pipeline_mode = #tpu.pipeline_mode<synchronous>, transform_indices = @transform_2, window_bounds = array<i64: 1, 32>}]} {
    %c0_i32 = arith.constant 0 : i32
    %0 = arith.cmpi eq, %arg0, %c0_i32 : i32
    %1 = arith.extui %0 : i1 to i32
    %c0_i32_0 = arith.constant 0 : i32
    %2 = arith.cmpi ne, %1, %c0_i32_0 : i32
    scf.if %2 {
      %cst_13 = arith.constant 0.000000e+00 : f32
      %18 = vector.broadcast %cst_13 : f32 to vector<1x32xf32>
      %c0_14 = arith.constant 0 : index
      %c0_15 = arith.constant 0 : index
      %19 = vector.load %arg2[%c0_14, %c0_15] : memref<1x32xf32, #tpu.memory_space<vmem>>, vector<1x32xf32>
      tpu.vector_store %arg2[%c0_14, %c0_15], %18 {strides = array<i32>} : memref<1x32xf32, #tpu.memory_space<vmem>>, vector<1x32xf32>,
      %cst_16 = arith.constant 0.000000e+00 : f32
      %20 = vector.broadcast %cst_16 : f32 to vector<1x32xf32>
      %c0_17 = arith.constant 0 : index
      %c0_18 = arith.constant 0 : index
      %21 = vector.load %arg3[%c0_17, %c0_18] : memref<1x32xf32, #tpu.memory_space<vmem>>, vector<1x32xf32>
      tpu.vector_store %arg3[%c0_17, %c0_18], %20 {strides = array<i32>} : memref<1x32xf32, #tpu.memory_space<vmem>>, vector<1x32xf32>,
    } else {
    }
    %c0 = arith.constant 0 : index
    %c0_1 = arith.constant 0 : index
    %3 = vector.load %arg1[%c0, %c0_1] : memref<8x32xf32, #tpu.memory_space<vmem>>, vector<8x32xf32>
    %c0_2 = arith.constant 0 : index
    %c0_3 = arith.constant 0 : index
    %4 = vector.load %arg2[%c0_2, %c0_3] : memref<1x32xf32, #tpu.memory_space<vmem>>, vector<1x32xf32>
    %cst = arith.constant dense<0.000000e+00> : vector<32xf32>
    %5 = vector.multi_reduction <add>, %3, %cst [0] : vector<8x32xf32> to vector<32xf32>
    %6 = vector.shape_cast %5 : vector<32xf32> to vector<1x32xf32>
    %7 = arith.addf %4, %6 : vector<1x32xf32>
    %c0_4 = arith.constant 0 : index
    %c0_5 = arith.constant 0 : index
    %8 = vector.load %arg2[%c0_4, %c0_5] : memref<1x32xf32, #tpu.memory_space<vmem>>, vector<1x32xf32>
    tpu.vector_store %arg2[%c0_4, %c0_5], %7 {strides = array<i32>} : memref<1x32xf32, #tpu.memory_space<vmem>>, vector<1x32xf32>,
    %c0_6 = arith.constant 0 : index
    %c0_7 = arith.constant 0 : index
    %9 = vector.load %arg3[%c0_6, %c0_7] : memref<1x32xf32, #tpu.memory_space<vmem>>, vector<1x32xf32>
    %10 = arith.mulf %3, %3 : vector<8x32xf32>
    %cst_8 = arith.constant dense<0.000000e+00> : vector<32xf32>
    %11 = vector.multi_reduction <add>, %10, %cst_8 [0] : vector<8x32xf32> to vector<32xf32>
    %12 = vector.shape_cast %11 : vector<32xf32> to vector<1x32xf32>
    %13 = arith.addf %9, %12 : vector<1x32xf32>
    %c0_9 = arith.constant 0 : index
    %c0_10 = arith.constant 0 : index
    %14 = vector.load %arg3[%c0_9, %c0_10] : memref<1x32xf32, #tpu.memory_space<vmem>>, vector<1x32xf32>
    tpu.vector_store %arg3[%c0_9, %c0_10], %13 {strides = array<i32>} : memref<1x32xf32, #tpu.memory_space<vmem>>, vector<1x32xf32>,
    %c0_i32_11 = arith.constant 0 : i32
    %15 = arith.cmpi eq, %arg0, %c0_i32_11 : i32
    %16 = arith.extui %15 : i1 to i32
    %c0_i32_12 = arith.constant 0 : i32
    %17 = arith.cmpi ne, %16, %c0_i32_12 : i32
    scf.if %17 {
      %c0_13 = arith.constant 0 : index
      %c0_14 = arith.constant 0 : index
      %18 = vector.load %arg2[%c0_13, %c0_14] : memref<1x32xf32, #tpu.memory_space<vmem>>, vector<1x32xf32>
      %cst_15 = arith.constant 1.250000e-01 : f32
      %19 = vector.broadcast %cst_15 : f32 to vector<1x32xf32>
      %20 = arith.mulf %18, %19 : vector<1x32xf32>
      %c0_16 = arith.constant 0 : index
      %c0_17 = arith.constant 0 : index
      %21 = vector.load %arg3[%c0_16, %c0_17] : memref<1x32xf32, #tpu.memory_space<vmem>>, vector<1x32xf32>
      %cst_18 = arith.constant 1.250000e-01 : f32
      %22 = vector.broadcast %cst_18 : f32 to vector<1x32xf32>
      %23 = arith.mulf %21, %22 : vector<1x32xf32>
      %24 = arith.mulf %20, %20 : vector<1x32xf32>
      %25 = arith.subf %23, %24 : vector<1x32xf32>
      %cst_19 = arith.constant 0.000000e+00 : f32
      %26 = vector.broadcast %cst_19 : f32 to vector<1x32xf32>
      %27 = arith.maximumf %25, %26 : vector<1x32xf32>
      %c0_20 = arith.constant 0 : index
      %c0_21 = arith.constant 0 : index
      %28 = vector.load %arg2[%c0_20, %c0_21] : memref<1x32xf32, #tpu.memory_space<vmem>>, vector<1x32xf32>
      tpu.vector_store %arg2[%c0_20, %c0_21], %20 {strides = array<i32>} : memref<1x32xf32, #tpu.memory_space<vmem>>, vector<1x32xf32>,
      %cst_22 = arith.constant 9.99999974E-6 : f32
      %29 = vector.broadcast %cst_22 : f32 to vector<1x32xf32>
      %30 = arith.addf %27, %29 : vector<1x32xf32>
      %31 = math.rsqrt %30 : vector<1x32xf32>
      %c0_23 = arith.constant 0 : index
      %c0_24 = arith.constant 0 : index
      %32 = vector.load %arg3[%c0_23, %c0_24] : memref<1x32xf32, #tpu.memory_space<vmem>>, vector<1x32xf32>
      tpu.vector_store %arg3[%c0_23, %c0_24], %31 {strides = array<i32>} : memref<1x32xf32, #tpu.memory_space<vmem>>, vector<1x32xf32>,
    } else {
    }
    return
  }
  func.func @transform_0(%arg0: i32) -> (i32, i32) {
    %c0_i32 = arith.constant 0 : i32
    %c0_i32_0 = arith.constant 0 : i32
    return %arg0, %c0_i32 : i32, i32
  }
  func.func @transform_1(%arg0: i32) -> (i32, i32) {
    %c0_i32 = arith.constant 0 : i32
    %c0_i32_0 = arith.constant 0 : i32
    %c0_i32_1 = arith.constant 0 : i32
    return %c0_i32, %c0_i32_0 : i32, i32
  }
  func.func @transform_2(%arg0: i32) -> (i32, i32) {
    %c0_i32 = arith.constant 0 : i32
    %c0_i32_0 = arith.constant 0 : i32
    %c0_i32_1 = arith.constant 0 : i32
    return %c0_i32, %c0_i32_0 : i32, i32
  }
}

</mosaic_0001>

<llo_original>
// kernel: tpu_custom_call.1
$region0: #{tpu_custom_call.1}
  #allocation0 [shape = 'u32[]', space=smem, size = 0x4, offset = 0x4, fixed_abs, tag = 'smem constant byte address 0x4 - core index']
  #allocation1 [shape = 'u32[144,128]{1,0:T(1,128)}', space=vmem, size = 0x12000, scoped, tag = 'internal scratch']
  %s0 = inlined_call_operand.hbm [shape: f32[8,32], index: 0, kind: input, shape index: {}]
  %s1 = inlined_call_operand.hbm [shape: f32[1,32], index: 1, kind: output, shape index: {0}]
  %s2 = inlined_call_operand.hbm [shape: f32[1,32], index: 2, kind: output, shape index: {1}]
  %3 = xla_tuple %s1, %s2
  %s4 = sld [smem:[#allocation0]]
  $region34: #{tpu_custom_call.1} parent=0
    _
  %s6 = ssub.s32 1, %s4
  %s7 = scalar_select 0, %s6, %s4
  $region1: #{tpu_custom_call.1} parent=0
    #allocation2 [shape = 'u8[4096]{0}', space=vmem, size = 0x1000, scoped, tag = 'input window, operand 0, single buffered']
    #allocation3 [shape = 's32[1]{0}', space=sflag, size = 0x4, scoped, tag = 'scoped memory for tpu_custom_call.1']
    #allocation4 [shape = 's32[1]{0}', space=sflag, size = 0x4, scoped, tag = 'scoped memory for tpu_custom_call.1']
    #allocation5 [shape = 'u8[512]{0}', space=vmem, size = 0x400, scoped, tag = 'output window, operand 0, single buffered']
    #allocation6 [shape = 'u8[512]{0}', space=vmem, size = 0x400, scoped, tag = 'output window, operand 1, single buffered']
    #allocation7 [shape = 's32[1]{0}', space=sflag, size = 0x4, scoped, tag = 'scoped memory for tpu_custom_call.1']
    %8 = vsyncpa [#allocation3], 0
    %9 = vsyncpa [#allocation4], 0
    %10 = vsyncpa [#allocation7], 0
    // Predicated region
    $region2: #{tpu_custom_call.1} parent=1 // pred_check
      _
    $region3: #{tpu_custom_call.1} parent=1 // pred_check_branch
      %12 = sbr.rel (0) target = $region5
    $region4: #{tpu_custom_call.1} parent=1 // pred_region
      %s14 = ssub.s32 128, 128
      %15 = vsyncadd [#allocation3], %s14
      %s17 = sshll.u32 [#allocation2], 4
      %s18 = int_to_ptr.vmem [resolvable:$true] %s17
      %20 = dma.hbm_to_vmem [thread:$0]  %s0, 128, %s18, [#allocation3]
    $region5: #{tpu_custom_call.1} parent=1 // pred_fallthru
      _
    // Predicated region
    $region6: #{tpu_custom_call.1} parent=1 // pred_check
      _
    $region7: #{tpu_custom_call.1} parent=1 // pred_check_branch
      %22 = sbr.rel (0) target = $region9
    $region8: #{tpu_custom_call.1} parent=1 // pred_region
      %23 = dma.done [#allocation3], 128
    $region9: #{tpu_custom_call.1} parent=1 // pred_fallthru
      _
    %p24 = scmp.eq.s32.totalorder 0, 0
    // Predicated region
    $region10: #{tpu_custom_call.1} parent=1 // pred_check
      %p25 = pneg %p24
    $region11: #{tpu_custom_call.1} parent=1 // pred_check_branch
      %27 = sbr.rel (%p25) target = $region13
    $region12: #{tpu_custom_call.1} parent=1 // pred_region
      %vm28 = vcmask 253952
      %29 = vst.msk [vmem:[#allocation5] sm:$0x1] %vm28, 0.0
      %30 = vst.msk [vmem:[#allocation6] sm:$0x1] %vm28, 0.0
    $region13: #{tpu_custom_call.1} parent=1 // pred_fallthru
      _
    %v31 = vld [vmem:[#allocation2] sm:$0xff]
    %v32 = vld [vmem:[#allocation5] sm:$0x1]
    %vm33 = vcmask 261120
    %v34 = vsel %vm33, %v31, 0.0
    %v35 = vrot.slane %v34, 4
    %v36 = vadd.f32 %v34, %v35
    %v37 = vrot.slane %v36, 2
    %v38 = vadd.f32 %v36, %v37
    %v39 = vrot.slane %v38, 1
    %v40 = vadd.f32 %v38, %v39
    %v41 = vadd.f32 %v32, %v40
    %vm42 = vcmask 253952
    %43 = vst.msk [vmem:[#allocation5] sm:$0x1] %vm42, %v41
    %v44 = vld [vmem:[#allocation6] sm:$0x1]
    %v45 = vmul.f32 %v31, %v31
    %v46 = vsel %vm33, %v45, 0.0
    %v47 = vrot.slane %v46, 4
    %v48 = vadd.f32 %v46, %v47
    %v49 = vrot.slane %v48, 2
    %v50 = vadd.f32 %v48, %v49
    %v51 = vrot.slane %v50, 1
    %v52 = vadd.f32 %v50, %v51
    %v53 = vadd.f32 %v44, %v52
    %54 = vst.msk [vmem:[#allocation6] sm:$0x1] %vm42, %v53
    // Predicated region
    $region14: #{tpu_custom_call.1} parent=1 // pred_check
      %p55 = pneg %p24
    $region15: #{tpu_custom_call.1} parent=1 // pred_check_branch
      %57 = sbr.rel (%p55) target = $region17
    $region16: #{tpu_custom_call.1} parent=1 // pred_region
      %v58 = vld [vmem:[#allocation5] sm:$0x1]
      %v59 = vmul.f32 %v58, 0.125
      %v60 = vld [vmem:[#allocation6] sm:$0x1]
      %v61 = vmul.f32 %v60, 0.125
      %v62 = vmul.f32 %v59, %v59
      %v63 = vsub.f32 %v61, %v62
      %v64 = vmax.f32 %v63, 0.0
      %65 = vst.msk [vmem:[#allocation5] sm:$0x1] %vm42, %v59
      %v66 = vadd.f32 %v64, 1e-05
      %v67 = vrsqrt.pop %v66
      %68 = vst.msk [vmem:[#allocation6] sm:$0x1] %vm42, %v67
    $region17: #{tpu_custom_call.1} parent=1 // pred_fallthru
      _
    // Predicated region
    $region18: #{tpu_custom_call.1} parent=1 // pred_check
      _
    $region19: #{tpu_custom_call.1} parent=1 // pred_check_branch
      %70 = sbr.rel (0) target = $region21
    $region20: #{tpu_custom_call.1} parent=1 // pred_region
      %s72 = ssub.s32 16, 16
      %73 = vsyncadd [#allocation4], %s72
      %s75 = sshll.u32 [#allocation5], 4
      %s76 = int_to_ptr.vmem [resolvable:$true] %s75
      %78 = dma.vmem_to_hbm [thread:$0]  %s76, 16, %s1, [#allocation4]
    $region21: #{tpu_custom_call.1} parent=1 // pred_fallthru
      _
    // Predicated region
    $region22: #{tpu_custom_call.1} parent=1 // pred_check
      _
    $region23: #{tpu_custom_call.1} parent=1 // pred_check_branch
      %80 = sbr.rel (0) target = $region25
    $region24: #{tpu_custom_call.1} parent=1 // pred_region
      %s82 = ssub.s32 16, 16
      %83 = vsyncadd [#allocation7], %s82
      %s85 = sshll.u32 [#allocation6], 4
      %s86 = int_to_ptr.vmem [resolvable:$true] %s85
      %88 = dma.vmem_to_hbm [thread:$0]  %s86, 16, %s2, [#allocation7]
    $region25: #{tpu_custom_call.1} parent=1 // pred_fallthru
      _
    // Predicated region
    $region26: #{tpu_custom_call.1} parent=1 // pred_check
      _
    $region27: #{tpu_custom_call.1} parent=1 // pred_check_branch
      %90 = sbr.rel (0) target = $region29
    $region28: #{tpu_custom_call.1} parent=1 // pred_region
      %91 = dma.done [#allocation4], 16
    $region29: #{tpu_custom_call.1} parent=1 // pred_fallthru
      _
    // Predicated region
    $region30: #{tpu_custom_call.1} parent=1 // pred_check
      _
    $region31: #{tpu_custom_call.1} parent=1 // pred_check_branch
      %93 = sbr.rel (0) target = $region33
    $region32: #{tpu_custom_call.1} parent=1 // pred_region
      %94 = dma.done [#allocation7], 16
    $region33: #{tpu_custom_call.1} parent=1 // pred_fallthru
      _
    %95 = vsyncpa [#allocation3], 1
    %96 = vsyncpa [#allocation4], 1
    %97 = vsyncpa [#allocation7], 1

</llo_original>
